<compile_context>
chip_gen: v6e
topology: v6e:2x2x1
jax: 0.10.0
libtpu: 0.0.40
codegen_flags: <defaults>
</compile_context>

<pallas_src>
import jax
import jax.numpy as jnp
from jax.experimental import pallas as pl
from jax.experimental.pallas import tpu as pltpu

_LANES = 128
_SUBLANES = 8


def _round_up(x: int, mult: int) -> int:
    return ((x + mult - 1) // mult) * mult


def _make_kernel(rows_valid: int, steps: int):
    """Build the kernel with the (static) valid row count / steps baked in."""

    def kernel(m_ref, ew_ref, label_ref, out_ref):
        c = pl.program_id(0)          # core (parallel) axis
        i = pl.program_id(1)          # reduction (arbitrary) axis
        tm = ew_ref.shape[0]          # static tile rows

        # Output block index is constant across i -> resident accumulator.
        @pl.when(i == 0)
        def _init():
            out_ref[...] = jnp.zeros_like(out_ref)

        ew = ew_ref[...]              # (tm, 128) f32
        label = label_ref[...]        # (tm, 128) f32
        m = m_ref[0]                  # runtime scalar from SMEM

        one_minus = 1.0 - ew
        l1 = 0.25 * (one_minus * one_minus)
        ew_hi = jnp.where(ew < m, jnp.float32(0.0), ew)
        l0 = ew_hi * ew_hi
        # label*l1 + (1-label)*l0  ==  l0 + label*(l1 - l0)   (one fewer vmul)
        loss = l0 + label * (l1 - l0)

        row_start = (c * steps + i) * tm   # intended global first row

        # Full blocks: pure vreg adds, no masking.
        @pl.when(row_start + tm <= rows_valid)
        def _acc_full():
            out_ref[...] += loss.reshape(-1, _SUBLANES, _LANES).sum(0)

        # Ragged tail block (or fully-masked duplicate block from an uneven
        # core split): mask out rows beyond the valid range before summing.
        @pl.when(row_start + tm > rows_valid)
        def _acc_partial():
            rows = row_start + jax.lax.broadcasted_iota(jnp.int32, loss.shape, 0)
            masked = jnp.where(rows < rows_valid, loss, jnp.float32(0.0))
            out_ref[...] += masked.reshape(-1, _SUBLANES, _LANES).sum(0)

    return kernel


def contrastive_loss(ew, label, m, *, tile_rows=2048, num_cores=2):
    """Pallas TPU implementation of ContrastiveLoss.forward(ew, label, m)."""
    ew_flat = jnp.ravel(ew)
    label_flat = jnp.ravel(label)
    if ew_flat.dtype != jnp.float32:
        ew_flat = ew_flat.astype(jnp.float32)
    if label_flat.dtype != jnp.float32:
        label_flat = label_flat.astype(jnp.float32)
    n = ew_flat.shape[0]

    # Lane-dense [rows, 128] layout; pad only to a multiple of 8 rows
    # (< 1024 zero elements; label=0, ew=0 contributes exactly 0 for any m).
    rows_needed = max(1, pl.cdiv(n, _LANES))
    rows_valid = _round_up(rows_needed, _SUBLANES)
    pad = rows_valid * _LANES - n
    if pad:
        ew_flat = jnp.pad(ew_flat, (0, pad))
        label_flat = jnp.pad(label_flat, (0, pad))

    ew2d = ew_flat.reshape(rows_valid, _LANES)
    label2d = label_flat.reshape(rows_valid, _LANES)
    m_arr = jnp.asarray(m, dtype=jnp.float32).reshape(1)

    # Tiling: big tile (1 MiB/input at 2048 rows), shrink for tiny inputs.
    tm = min(_round_up(tile_rows, _SUBLANES), rows_valid)
    total_blocks = pl.cdiv(rows_valid, tm)
    cores = max(1, min(num_cores, total_blocks))   # 2-way split for v7x TCs
    steps = pl.cdiv(total_blocks, cores)

    if cores * steps == total_blocks:
        blk_map = lambda c, i: (c * steps + i, 0)
    else:
        # Uneven split: clamp the overshoot block (it is fully masked in-kernel).
        blk_map = lambda c, i: (jnp.minimum(c * steps + i, total_blocks - 1), 0)

    kernel = _make_kernel(rows_valid, steps)

    out = pl.pallas_call(
        kernel,
        out_shape=jax.ShapeDtypeStruct((cores * _SUBLANES, _LANES), jnp.float32),
        grid_spec=pltpu.PrefetchScalarGridSpec(
            num_scalar_prefetch=0,
            grid=(cores, steps),
            in_specs=[
                pl.BlockSpec(memory_space=pltpu.MemorySpace.SMEM),  # m (1,)
                pl.BlockSpec((tm, _LANES), blk_map),                # ew tile
                pl.BlockSpec((tm, _LANES), blk_map),                # label tile
            ],
            out_specs=pl.BlockSpec((_SUBLANES, _LANES), lambda c, i: (c, 0)),
        ),
        compiler_params=pltpu.CompilerParams(
            dimension_semantics=("parallel", "arbitrary")),
    )(m_arr, ew2d, label2d)

    # Final tiny cross-lane reduce (cores*8*128 f32) done by XLA.
    return jnp.sum(out)


def _reference(ew, label, m):
    ew = jnp.ravel(ew).astype(jnp.float32)
    label = jnp.ravel(label).astype(jnp.float32)
    l1 = 0.25 * (1.0 - ew) * (1.0 - ew)
    ew_hi = jnp.where(ew < m, 0.0, ew)
    l0 = ew_hi * ew_hi
    return jnp.sum(label * l1 + (1.0 - label) * l0)


if __name__ == "__main__":
    key = jax.random.PRNGKey(0)
    k_ew, k_lbl = jax.random.split(key)

    # ew: similarity metric per sample position; label: 0/1; m: threshold.
    batch, seq, hidden = 2, 8, 32
    ew = jax.random.uniform(k_ew, (batch, seq, hidden), jnp.float32, -1.0, 1.0)
    label = jax.random.bernoulli(k_lbl, 0.5, (batch, seq, hidden)).astype(jnp.float32)
    m = 0.5

    out = contrastive_loss(ew, label, m)
    out = jax.block_until_ready(out)
    ref = _reference(ew, label, m)
    assert out.shape == ()
    assert jnp.allclose(out, ref, rtol=1e-5, atol=1e-4), (out, ref)

    # Also exercise the multi-block / 2-core / ragged-tail / clamped-block
    # paths with a deliberately unaligned size and a tiny tile.
    k2a, k2b = jax.random.split(jax.random.PRNGKey(1))
    n2 = 5000
    ew2 = jax.random.uniform(k2a, (n2,), jnp.float32, -1.0, 1.0)
    label2 = jax.random.bernoulli(k2b, 0.5, (n2,)).astype(jnp.float32)
    out2 = jax.block_until_ready(contrastive_loss(ew2, label2, 0.3, tile_rows=16))
    ref2 = _reference(ew2, label2, 0.3)
    assert jnp.allclose(out2, ref2, rtol=1e-5, atol=1e-4), (out2, ref2)

    print("KERNEL_OK")
</pallas_src>

<mosaic_0001>
module attributes {stable_mosaic.version = 11 : i64} {
  func.func @kernel(%arg0: i32, %arg1: i32, %arg2: memref<1xf32, #tpu.memory_space<smem>>, %arg3: memref<8x128xf32, #tpu.memory_space<vmem>>, %arg4: memref<8x128xf32, #tpu.memory_space<vmem>>, %arg5: memref<8x128xf32, #tpu.memory_space<vmem>>) attributes {dimension_semantics = [#tpu.dimension_semantics<parallel>, #tpu.dimension_semantics<arbitrary>], iteration_bounds = array<i64: 1, 1>, scalar_prefetch = 0 : i64, scratch_operands = 0 : i64, tpu.core_type = #tpu.core_type<tc>, window_params = [{transform_indices = @transform_0, window_bounds = array<i64: 1>}, {transform_indices = @transform_1, window_bounds = array<i64: 8, 128>}, {transform_indices = @transform_2, window_bounds = array<i64: 8, 128>}, {transform_indices = @transform_3, window_bounds = array<i64: 8, 128>}]} {
    %c0_i32 = arith.constant 0 : i32
    %0 = arith.cmpi eq, %arg1, %c0_i32 : i32
    %1 = arith.extui %0 : i1 to i32
    %c0_i32_0 = arith.constant 0 : i32
    %2 = arith.cmpi ne, %1, %c0_i32_0 : i32
    scf.if %2 {
      %cst_13 = arith.constant 0.000000e+00 : f32
      %30 = vector.broadcast %cst_13 : f32 to vector<8x128xf32>
      %c0_14 = arith.constant 0 : index
      %c0_15 = arith.constant 0 : index
      %31 = vector.load %arg5[%c0_14, %c0_15] : memref<8x128xf32, #tpu.memory_space<vmem>>, vector<8x128xf32>
      tpu.vector_store %arg5[%c0_14, %c0_15], %30 {strides = array<i32>} : memref<8x128xf32, #tpu.memory_space<vmem>>, vector<8x128xf32>,
    } else {
    }
    %c0 = arith.constant 0 : index
    %c0_1 = arith.constant 0 : index
    %3 = vector.load %arg3[%c0, %c0_1] : memref<8x128xf32, #tpu.memory_space<vmem>>, vector<8x128xf32>
    %c0_2 = arith.constant 0 : index
    %c0_3 = arith.constant 0 : index
    %4 = vector.load %arg4[%c0_2, %c0_3] : memref<8x128xf32, #tpu.memory_space<vmem>>, vector<8x128xf32>
    %c0_4 = arith.constant 0 : index
    %5 = memref.load %arg2[%c0_4] : memref<1xf32, #tpu.memory_space<smem>>
    %cst = arith.constant 1.000000e+00 : f32
    %6 = vector.broadcast %cst : f32 to vector<8x128xf32>
    %7 = arith.subf %6, %3 : vector<8x128xf32>
    %8 = arith.mulf %7, %7 : vector<8x128xf32>
    %cst_5 = arith.constant 2.500000e-01 : f32
    %9 = vector.broadcast %cst_5 : f32 to vector<8x128xf32>
    %10 = arith.mulf %9, %8 : vector<8x128xf32>
    %11 = vector.broadcast %5 : f32 to vector<8x128xf32>
    %12 = arith.cmpf olt, %3, %11 : vector<8x128xf32>
    %cst_6 = arith.constant 0.000000e+00 : f32
    %13 = vector.broadcast %cst_6 : f32 to vector<8x128xf32>
    %14 = arith.select %12, %13, %3 : vector<8x128xi1>, vector<8x128xf32>
    %15 = arith.mulf %14, %14 : vector<8x128xf32>
    %16 = arith.subf %10, %15 : vector<8x128xf32>
    %17 = arith.mulf %4, %16 : vector<8x128xf32>
    %18 = arith.addf %15, %17 : vector<8x128xf32>
    %c1_i32 = arith.constant 1 : i32
    %19 = arith.muli %arg0, %c1_i32 : i32
    %20 = arith.addi %19, %arg1 : i32
    %c8_i32 = arith.constant 8 : i32
    %21 = arith.muli %20, %c8_i32 : i32
    %c8_i32_7 = arith.constant 8 : i32
    %22 = arith.addi %21, %c8_i32_7 : i32
    %c8_i32_8 = arith.constant 8 : i32
    %23 = arith.cmpi sle, %22, %c8_i32_8 : i32
    %24 = arith.extui %23 : i1 to i32
    %c0_i32_9 = arith.constant 0 : i32
    %25 = arith.cmpi ne, %24, %c0_i32_9 : i32
    scf.if %25 {
      %c0_13 = arith.constant 0 : index
      %c0_14 = arith.constant 0 : index
      %30 = vector.load %arg5[%c0_13, %c0_14] : memref<8x128xf32, #tpu.memory_space<vmem>>, vector<8x128xf32>
      %31 = vector.shape_cast %18 : vector<8x128xf32> to vector<1x8x128xf32>
      %cst_15 = arith.constant dense<0.000000e+00> : vector<8x128xf32>
      %32 = vector.multi_reduction <add>, %31, %cst_15 [0] : vector<1x8x128xf32> to vector<8x128xf32>
      %33 = arith.addf %30, %32 : vector<8x128xf32>
      %c0_16 = arith.constant 0 : index
      %c0_17 = arith.constant 0 : index
      %34 = vector.load %arg5[%c0_16, %c0_17] : memref<8x128xf32, #tpu.memory_space<vmem>>, vector<8x128xf32>
      tpu.vector_store %arg5[%c0_16, %c0_17], %33 {strides = array<i32>} : memref<8x128xf32, #tpu.memory_space<vmem>>, vector<8x128xf32>,
    } else {
    }
    %c8_i32_10 = arith.constant 8 : i32
    %26 = arith.addi %21, %c8_i32_10 : i32
    %c8_i32_11 = arith.constant 8 : i32
    %27 = arith.cmpi sgt, %26, %c8_i32_11 : i32
    %28 = arith.extui %27 : i1 to i32
    %c0_i32_12 = arith.constant 0 : i32
    %29 = arith.cmpi ne, %28, %c0_i32_12 : i32
    scf.if %29 {
      %30 = tpu.iota {dimensions = array<i32: 0>} : vector<8x128xi32>
      %31 = vector.broadcast %21 : i32 to vector<8x128xi32>
      %32 = arith.addi %31, %30 : vector<8x128xi32>
      %c8_i32_13 = arith.constant 8 : i32
      %33 = vector.broadcast %c8_i32_13 : i32 to vector<8x128xi32>
      %34 = arith.cmpi slt, %32, %33 : vector<8x128xi32>
      %cst_14 = arith.constant 0.000000e+00 : f32
      %35 = vector.broadcast %cst_14 : f32 to vector<8x128xf32>
      %36 = arith.select %34, %18, %35 : vector<8x128xi1>, vector<8x128xf32>
      %c0_15 = arith.constant 0 : index
      %c0_16 = arith.constant 0 : index
      %37 = vector.load %arg5[%c0_15, %c0_16] : memref<8x128xf32, #tpu.memory_space<vmem>>, vector<8x128xf32>
      %38 = vector.shape_cast %36 : vector<8x128xf32> to vector<1x8x128xf32>
      %cst_17 = arith.constant dense<0.000000e+00> : vector<8x128xf32>
      %39 = vector.multi_reduction <add>, %38, %cst_17 [0] : vector<1x8x128xf32> to vector<8x128xf32>
      %40 = arith.addf %37, %39 : vector<8x128xf32>
      %c0_18 = arith.constant 0 : index
      %c0_19 = arith.constant 0 : index
      %41 = vector.load %arg5[%c0_18, %c0_19] : memref<8x128xf32, #tpu.memory_space<vmem>>, vector<8x128xf32>
      tpu.vector_store %arg5[%c0_18, %c0_19], %40 {strides = array<i32>} : memref<8x128xf32, #tpu.memory_space<vmem>>, vector<8x128xf32>,
    } else {
    }
    return
  }
  func.func @transform_0(%arg0: i32, %arg1: i32) -> i32 {
    %c0_i32 = arith.constant 0 : i32
    %c0_i32_0 = arith.constant 0 : i32
    return %c0_i32 : i32
  }
  func.func @transform_1(%arg0: i32, %arg1: i32) -> (i32, i32) {
    %c1_i32 = arith.constant 1 : i32
    %0 = arith.muli %arg0, %c1_i32 : i32
    %1 = arith.addi %0, %arg1 : i32
    %c0_i32 = arith.constant 0 : i32
    %c0_i32_0 = arith.constant 0 : i32
    return %1, %c0_i32 : i32, i32
  }
  func.func @transform_2(%arg0: i32, %arg1: i32) -> (i32, i32) {
    %c1_i32 = arith.constant 1 : i32
    %0 = arith.muli %arg0, %c1_i32 : i32
    %1 = arith.addi %0, %arg1 : i32
    %c0_i32 = arith.constant 0 : i32
    %c0_i32_0 = arith.constant 0 : i32
    return %1, %c0_i32 : i32, i32
  }
  func.func @transform_3(%arg0: i32, %arg1: i32) -> (i32, i32) {
    %c0_i32 = arith.constant 0 : i32
    %c0_i32_0 = arith.constant 0 : i32
    return %arg0, %c0_i32 : i32, i32
  }
}

</mosaic_0001>

<llo_original>
// kernel: tpu_custom_call.1
$region0: #{tpu_custom_call.1}
  #allocation0 [shape = 'u32[]', space=smem, size = 0x4, offset = 0x4, fixed_abs, tag = 'smem constant byte address 0x4 - core index']
  #allocation1 [shape = 'u32[144,128]{1,0:T(1,128)}', space=vmem, size = 0x12000, scoped, tag = 'internal scratch']
  #allocation2 [shape = 'f32[1]{0:T(128)S(6)}', space=smem, size = 0x200, scoped, tag = 'scoped memory for tpu_custom_call.1']
  %s0 = inlined_call_operand.<no memory space> [shape: f32[1], index: 0, kind: input, shape index: {}]
  %s1 = inlined_call_operand.hbm [shape: f32[8,128], index: 1, kind: input, shape index: {}]
  %s2 = inlined_call_operand.hbm [shape: f32[8,128], index: 2, kind: input, shape index: {}]
  %s3 = inlined_call_operand.hbm [shape: f32[8,128], index: 3, kind: output, shape index: {}]
  %s4 = sld [smem:[#allocation0]]
  $region42: #{tpu_custom_call.1} parent=0
    _
  %s6 = ssub.s32 1, %s4
  %s7 = scalar_select 0, %s6, %s4
  %8 = sst [smem:[#allocation2]] %s0
  $region1: #{tpu_custom_call.1} parent=0
    #allocation3 [shape = 'u8[4096]{0}', space=vmem, size = 0x1000, scoped, tag = 'input window, operand 1, single buffered']
    #allocation4 [shape = 's32[1]{0}', space=sflag, size = 0x4, scoped, tag = 'scoped memory for tpu_custom_call.1']
    #allocation5 [shape = 's32[1]{0}', space=sflag, size = 0x4, scoped, tag = 'scoped memory for tpu_custom_call.1']
    #allocation6 [shape = 'u8[4096]{0}', space=vmem, size = 0x1000, scoped, tag = 'input window, operand 2, single buffered']
    #allocation7 [shape = 's32[1]{0}', space=sflag, size = 0x4, scoped, tag = 'scoped memory for tpu_custom_call.1']
    #allocation8 [shape = 'u8[4096]{0}', space=vmem, size = 0x1000, scoped, tag = 'output window, operand 0, single buffered']
    %9 = vsyncpa [#allocation4], 0
    %10 = vsyncpa [#allocation7], 0
    %11 = vsyncpa [#allocation5], 0
    // Predicated region
    $region2: #{tpu_custom_call.1} parent=1 // pred_check
      _
    $region3: #{tpu_custom_call.1} parent=1 // pred_check_branch
      %13 = sbr.rel (0) target = $region5
    $region4: #{tpu_custom_call.1} parent=1 // pred_region
      _
    $region5: #{tpu_custom_call.1} parent=1 // pred_fallthru
      _
    // Predicated region
    $region6: #{tpu_custom_call.1} parent=1 // pred_check
      _
    $region7: #{tpu_custom_call.1} parent=1 // pred_check_branch
      %15 = sbr.rel (0) target = $region9
    $region8: #{tpu_custom_call.1} parent=1 // pred_region
      %s16 = sadd.s32 0, 0
      %s18 = ssub.s32 128, 128
      %19 = vsyncadd [#allocation4], %s18
      %s20 = smul.addr %s16, 128
      %s21 = scalar_lea.hbm %s1, %s20
      %s23 = sshll.u32 [#allocation3], 4
      %s24 = int_to_ptr.vmem [resolvable:$true] %s23
      %26 = dma.hbm_to_vmem [thread:$0]  %s21, 128, %s24, [#allocation4]
    $region9: #{tpu_custom_call.1} parent=1 // pred_fallthru
      _
    // Predicated region
    $region10: #{tpu_custom_call.1} parent=1 // pred_check
      _
    $region11: #{tpu_custom_call.1} parent=1 // pred_check_branch
      %28 = sbr.rel (0) target = $region13
    $region12: #{tpu_custom_call.1} parent=1 // pred_region
      %s29 = sadd.s32 0, 0
      %s31 = ssub.s32 128, 128
      %32 = vsyncadd [#allocation7], %s31
      %s33 = smul.addr %s29, 128
      %s34 = scalar_lea.hbm %s2, %s33
      %s36 = sshll.u32 [#allocation6], 4
      %s37 = int_to_ptr.vmem [resolvable:$true] %s36
      %39 = dma.hbm_to_vmem [thread:$0]  %s34, 128, %s37, [#allocation7]
    $region13: #{tpu_custom_call.1} parent=1 // pred_fallthru
      _
    // Predicated region
    $region14: #{tpu_custom_call.1} parent=1 // pred_check
      _
    $region15: #{tpu_custom_call.1} parent=1 // pred_check_branch
      %41 = sbr.rel (0) target = $region17
    $region16: #{tpu_custom_call.1} parent=1 // pred_region
      %42 = dma.done [#allocation4], 128
    $region17: #{tpu_custom_call.1} parent=1 // pred_fallthru
      _
    // Predicated region
    $region18: #{tpu_custom_call.1} parent=1 // pred_check
      _
    $region19: #{tpu_custom_call.1} parent=1 // pred_check_branch
      %44 = sbr.rel (0) target = $region21
    $region20: #{tpu_custom_call.1} parent=1 // pred_region
      %45 = dma.done [#allocation7], 128
    $region21: #{tpu_custom_call.1} parent=1 // pred_fallthru
      _
    %s46 = sadd.s32 0, 0
    %s47 = sadd.s32 0, 0
    %p48 = scmp.eq.s32.totalorder 0, 0
    // Predicated region
    $region22: #{tpu_custom_call.1} parent=1 // pred_check
      %p49 = pneg %p48
    $region23: #{tpu_custom_call.1} parent=1 // pred_check_branch
      %51 = sbr.rel (%p49) target = $region25
    $region24: #{tpu_custom_call.1} parent=1 // pred_region
      %52 = vst [vmem:[#allocation8] sm:$0xff] 0.0
    $region25: #{tpu_custom_call.1} parent=1 // pred_fallthru
      _
    %v53 = vld [vmem:[#allocation3] sm:$0xff]
    %v54 = vld [vmem:[#allocation6] sm:$0xff]
    %s55 = sld [smem:[#allocation2]]
    %v56 = vsub.f32 1.0, %v53
    %v57 = vmul.f32 %v56, %v56
    %v58 = vmul.f32 %v57, 0.25
    %v59 = vstv %s55
    %vm60 = vcmp.lt.f32.partialorder %v53, %v59
    %v61 = vsel %vm60, 0.0, %v53
    %v62 = vmul.f32 %v61, %v61
    %v63 = vsub.f32 %v58, %v62
    %v64 = vmul.f32 %v54, %v63
    %v65 = vadd.f32 %v62, %v64
    %s66 = sadd.s32 0, 0
    %s67 = smul.u32 %s66, 8
    %s68 = sadd.s32 %s67, 8
    %p69 = scmp.le.s32.totalorder %s68, 8
    // Predicated region
    $region26: #{tpu_custom_call.1} parent=1 // pred_check
      %p70 = pneg %p69
    $region27: #{tpu_custom_call.1} parent=1 // pred_check_branch
      %72 = sbr.rel (%p70) target = $region29
    $region28: #{tpu_custom_call.1} parent=1 // pred_region
      %v73 = vld [vmem:[#allocation8] sm:$0xff]
      %v74 = vadd.f32 %v65, 0.0
      %v75 = vadd.f32 %v73, %v74
      %76 = vst [vmem:[#allocation8] sm:$0xff] %v75
    $region29: #{tpu_custom_call.1} parent=1 // pred_fallthru
      _
    %p77 = scmp.gt.s32.totalorder %s68, 8
    // Predicated region
    $region30: #{tpu_custom_call.1} parent=1 // pred_check
      %p78 = pneg %p77
    $region31: #{tpu_custom_call.1} parent=1 // pred_check_branch
      %80 = sbr.rel (%p78) target = $region33
    $region32: #{tpu_custom_call.1} parent=1 // pred_region
      %v81 = vlaneseq
      %v82 = vshrl.u32 %v81, 7
      %v83 = vstv %s67
      %v84 = vadd.s32 %v83, %v82
      %vm85 = vcmp.lt.s32.totalorder %v84, 8
      %v86 = vsel %vm85, %v65, 0.0
      %v87 = vld [vmem:[#allocation8] sm:$0xff]
      %v88 = vadd.f32 %v86, 0.0
      %v89 = vadd.f32 %v87, %v88
      %90 = vst [vmem:[#allocation8] sm:$0xff] %v89
    $region33: #{tpu_custom_call.1} parent=1 // pred_fallthru
      _
    // Predicated region
    $region34: #{tpu_custom_call.1} parent=1 // pred_check
      _
    $region35: #{tpu_custom_call.1} parent=1 // pred_check_branch
      %92 = sbr.rel (0) target = $region37
    $region36: #{tpu_custom_call.1} parent=1 // pred_region
      %s94 = ssub.s32 128, 128
      %95 = vsyncadd [#allocation5], %s94
      %s97 = sshll.u32 [#allocation8], 4
      %s98 = int_to_ptr.vmem [resolvable:$true] %s97
      %100 = dma.vmem_to_hbm [thread:$0]  %s98, 128, %s3, [#allocation5]
    $region37: #{tpu_custom_call.1} parent=1 // pred_fallthru
      _
    // Predicated region
    $region38: #{tpu_custom_call.1} parent=1 // pred_check
      _
    $region39: #{tpu_custom_call.1} parent=1 // pred_check_branch
      %102 = sbr.rel (0) target = $region41
    $region40: #{tpu_custom_call.1} parent=1 // pred_region
      %103 = dma.done [#allocation5], 128
    $region41: #{tpu_custom_call.1} parent=1 // pred_fallthru
      _
    %104 = vsyncpa [#allocation4], 1
    %105 = vsyncpa [#allocation7], 1
    %106 = vsyncpa [#allocation5], 1

</llo_original>
